<compile_context>
chip_gen: v5e
topology: v5e:2x2
jax: 0.10.0
libtpu: 0.0.40
codegen_flags: <defaults>
</compile_context>

<pallas_src>
import functools
import math

import jax
import jax.numpy as jnp
from jax.experimental import pallas as pl
from jax.experimental.pallas import tpu as pltpu


GAIN = 1.2      # deterministic params of the wrapped fn
BIAS = 0.1
P_APPLY = 0.5

_TARGET_BLOCK_BYTES = 2 << 20   # ~2 MiB blocks: on the HBM-roofline plateau,
                                # ~8 MiB resident when in+out double-buffered.
_MAX_BLOCK_BYTES = 8 << 20      # safety cap (stay well under scoped VMEM).
_PALLAS_MIN_BYTES = 1 << 20     # below this, fused XLA elementwise is cheaper.


def _fn(x):
    # The wrapped deterministic elementwise transform (color-jitter style).
    # Note: assumes floating-point images (as in MoCo); integer dtypes would
    # be promoted by the Python-float constants.
    return jnp.clip(x * GAIN + BIAS, 0.0, 1.0)


def _apply_fn_kernel(x_ref, o_ref):
    # Elementwise wrapped transform on one VMEM tile.  1 mul + 1 add + 2
    # min/max per element — VALU work is free under the HBM-bound DMA
    # pipeline.  The ragged last row-block also computes on stale VMEM rows,
    # but Pallas masks those stores, so it is harmless.
    o_ref[...] = _fn(x_ref[...]).astype(o_ref.dtype)


def _choose_tile_rows(rows, row_bytes):
    """Row tile: multiple of 8 (unless full dim), ~2 MiB blocks, and >= 2
    blocks when possible so both v7x TensorCores get work."""
    target = max(8, _TARGET_BLOCK_BYTES // max(1, row_bytes))
    tile = min(rows, target)
    if tile == rows and rows >= 16:
        tile = -(-rows // 2)                 # split into ~2 blocks (v7x TCs)
    if tile < rows:
        tile = max(8, -(-tile // 8) * 8)     # (8, 128) rule on sublane dim
        tile = min(tile, rows)
    return tile


def _pallas_apply(x):
    """fn(x) via a tiled, row-blocked Pallas kernel on a 2-D view of x."""
    orig_shape = x.shape
    total = math.prod(orig_shape)
    itemsize = jnp.dtype(x.dtype).itemsize

    if x.ndim < 2 or total * itemsize < _PALLAS_MIN_BYTES:
        # Tiny tensors: launch + DMA setup dominates; let XLA fuse it instead.
        return _fn(x)

    cols = orig_shape[-1]                 # full last dim -> legal block lane dim
    rows = total // cols
    # Merge leading dims only (no pad, no slice).  Layout-preserving (bitcast)
    # for the common image shapes (H % 8 == 0); at worst one relayout copy.
    x2d = x.reshape(rows, cols)

    tile_rows = _choose_tile_rows(rows, cols * itemsize)
    if tile_rows * cols * itemsize > _MAX_BLOCK_BYTES:
        # Degenerate shapes (enormous last dim): a single row-block would blow
        # VMEM; fall back to plain XLA.  TODO(synk): add a lane-tiled path.
        return _fn(x)

    grid = pl.cdiv(rows, tile_rows)       # ragged tail -> Pallas-masked block

    out2d = pl.pallas_call(
        _apply_fn_kernel,
        out_shape=jax.ShapeDtypeStruct((rows, cols), x.dtype),
        grid=(grid,),
        in_specs=[pl.BlockSpec((tile_rows, cols), lambda i: (i, 0))],
        out_specs=pl.BlockSpec((tile_rows, cols), lambda i: (i, 0)),
        compiler_params=pltpu.CompilerParams(
            dimension_semantics=("parallel",),   # shard row tiles across TCs on v7x
        ),
        cost_estimate=pl.CostEstimate(
            flops=4 * total,
            transcendentals=0,
            bytes_accessed=2 * total * itemsize,  # true, unpadded traffic
        ),
    )(x2d)

    return out2d.reshape(orig_shape)


@functools.partial(jax.jit, static_argnames=("p",))
def random_apply(x, key, p=P_APPLY):
    """RandomApply.forward: apply fn with probability p, else identity.

    Coin flip in the wrapper; lax.cond short-circuits the identity branch so
    the kernel (and its full HBM read+write) only runs when fn is applied.
    """
    u = jax.random.uniform(key, ())
    # torch: `if random.random() > p: return x` else fn(x)  ->  apply iff u <= p
    return jax.lax.cond(u <= p, _pallas_apply, lambda v: v, x)


if __name__ == "__main__":
    key = jax.random.PRNGKey(0)
    kx, kcoin, ksmall, kodd = jax.random.split(key, 4)

    # Small MoCo-style batch: 2 RGB images at 224x224.  Exercises the Pallas
    # path: rows = 2*3*224 = 1344, W = 224, two 672-row blocks.
    x = jax.random.uniform(kx, (2, 3, 224, 224), dtype=jnp.float32)

    out = jax.block_until_ready(random_apply(x, kcoin, p=P_APPLY))

    # Reference check (pure JAX) for whichever branch the coin took.
    u = jax.random.uniform(kcoin, ())
    ref = jnp.clip(x * GAIN + BIAS, 0.0, 1.0) if float(u) <= P_APPLY else x
    assert out.shape == x.shape and out.dtype == x.dtype
    assert jnp.allclose(out, ref, atol=1e-6), "mismatch vs reference"

    # Force both branches deterministically via p.
    out_always = jax.block_until_ready(random_apply(x, kcoin, p=1.0))
    out_never = jax.block_until_ready(random_apply(x, kcoin, p=0.0))
    assert jnp.allclose(out_always, jnp.clip(x * GAIN + BIAS, 0.0, 1.0), atol=1e-6)
    assert jnp.allclose(out_never, x, atol=1e-6)

    # Tiny input (2x4x16x16, 8 KiB) -> fused-XLA bypass path.
    xs = jax.random.uniform(ksmall, (2, 4, 16, 16), dtype=jnp.float32)
    out_s = jax.block_until_ready(random_apply(xs, kcoin, p=1.0))
    assert jnp.allclose(out_s, jnp.clip(xs * GAIN + BIAS, 0.0, 1.0), atol=1e-6)

    # Rows not a multiple of the tile, lanes not a multiple of 128, above the
    # bypass threshold -> Pallas path with a masked partial last block and no
    # wrapper-side pad/slice.
    xo = jax.random.uniform(kodd, (3, 3, 180, 180), dtype=jnp.float32)
    out_o = jax.block_until_ready(random_apply(xo, kcoin, p=1.0))
    assert jnp.allclose(out_o, jnp.clip(xo * GAIN + BIAS, 0.0, 1.0), atol=1e-6)

    print("KERNEL_OK")
</pallas_src>

<mosaic_0001>
module attributes {stable_mosaic.version = 11 : i64} {
  func.func @_apply_fn_kernel(%arg0: i32, %arg1: memref<672x224xf32, #tpu.memory_space<vmem>>, %arg2: memref<672x224xf32, #tpu.memory_space<vmem>>) attributes {dimension_semantics = [#tpu.dimension_semantics<parallel>], iteration_bounds = array<i64: 2>, scalar_prefetch = 0 : i64, scratch_operands = 0 : i64, tpu.core_type = #tpu.core_type<tc>, window_params = [{transform_indices = @transform_0, window_bounds = array<i64: 672, 224>}, {transform_indices = @transform_1, window_bounds = array<i64: 672, 224>}]} {
    %c0 = arith.constant 0 : index
    %c0_0 = arith.constant 0 : index
    %0 = vector.load %arg1[%c0, %c0_0] : memref<672x224xf32, #tpu.memory_space<vmem>>, vector<672x224xf32>
    %cst = arith.constant 1.200000e+00 : f32
    %1 = vector.broadcast %cst : f32 to vector<672x224xf32>
    %2 = arith.mulf %0, %1 : vector<672x224xf32>
    %cst_1 = arith.constant 1.000000e-01 : f32
    %3 = vector.broadcast %cst_1 : f32 to vector<672x224xf32>
    %4 = arith.addf %2, %3 : vector<672x224xf32>
    %cst_2 = arith.constant 0.000000e+00 : f32
    %cst_3 = arith.constant 1.000000e+00 : f32
    %5 = vector.broadcast %cst_2 : f32 to vector<672x224xf32>
    %6 = arith.maximumf %5, %4 : vector<672x224xf32>
    %7 = vector.broadcast %cst_3 : f32 to vector<672x224xf32>
    %8 = arith.minimumf %7, %6 : vector<672x224xf32>
    %c0_4 = arith.constant 0 : index
    %c0_5 = arith.constant 0 : index
    %9 = vector.load %arg2[%c0_4, %c0_5] : memref<672x224xf32, #tpu.memory_space<vmem>>, vector<672x224xf32>
    tpu.vector_store %arg2[%c0_4, %c0_5], %8 {strides = array<i32>} : memref<672x224xf32, #tpu.memory_space<vmem>>, vector<672x224xf32>,
    return
  }
  func.func @transform_0(%arg0: i32) -> (i32, i32) {
    %c0_i32 = arith.constant 0 : i32
    %c0_i32_0 = arith.constant 0 : i32
    return %arg0, %c0_i32 : i32, i32
  }
  func.func @transform_1(%arg0: i32) -> (i32, i32) {
    %c0_i32 = arith.constant 0 : i32
    %c0_i32_0 = arith.constant 0 : i32
    return %arg0, %c0_i32 : i32, i32
  }
}

</mosaic_0001>

<llo_original>
// kernel: branch_1_fun.1
$region0: #{branch_1_fun.1}
  #allocation0 [shape = 'u32[]', space=smem, size = 0x4, offset = 0x4, fixed_abs, tag = 'smem constant byte address 0x4 - core index']
  #allocation1 [shape = 'u32[72,128]{1,0:T(1,128)}', space=vmem, size = 0x9000, scoped, tag = 'internal scratch']
  %s0 = inlined_call_operand.vmem [shape: f32[1344,224], index: 0, kind: input, shape index: {}]
  %s1 = inlined_call_operand.hbm [shape: f32[1344,224], index: 1, kind: output, shape index: {}]
  %s2 = sld [smem:[#allocation0]]
  $region37: #{branch_1_fun.1} parent=0
    _
  %s4 = ssub.s32 1, %s2
  %s5 = scalar_select 0, %s4, %s2
  $region1: #{branch_1_fun.1} parent=0
    #allocation2 [shape = 'u8[1376256]{0}', space=vmem, size = 0x150000, scoped, tag = 'output window, operand 0']
    #allocation3 [shape = 's32[2]{0}', space=sflag, size = 0x8, scoped, tag = 'scoped memory for branch_1_fun.1']
    %6 = vsyncpa [#allocation3], 0
    %s7 = scalar_lea.sflag [#allocation3], 1
    %8 = vsyncpa %s7, 0
    loop: start=0, step=1, limit=4
    $region2: #{branch_1_fun.1} parent=1 // loop_pre_header
      _
    $region3: #{branch_1_fun.1} parent=1 // loop_header
      %s10 = sphi 0, %s14
      %p11 = scmp.ge.s32.totalorder %s10, 4
      %s20 = sphi 0, %s22
      %s23 = sphi 0, %s20
      %s24 = sphi 0, %s23
      %s40 = sphi 0, %s24
      %s46 = sphi 0, %s48
      %s49 = sphi 0, %s46
      %s50 = sphi 0, %s49
      %s66 = sphi 0, %s50
    $region4: #{branch_1_fun.1} parent=1 // loop_header_branch
      %13 = sbr.rel (%p11) target = $region8
    $region5: #{branch_1_fun.1} parent=1 // loop_body
      %s15 = ssub.s32 %s10, 1
      %s16 = ssub.s32 %s10, 2
      %s17 = sadd.s32 %s10, 1
      %s18 = ssub.s32 %s10, %s17
      %p19 = scmp.eq.s32.totalorder %s18, 0
      %s21 = sadd.s32 %s20, 1
      %s22 = scalar_select %p19, %s20, %s21
      %p25 = pneg %p19
      %p26 = scmp.eq.s32.totalorder %s10, 1
      %p27 = por %p25, %p26
      %p28 = scmp.ne.s32.totalorder %s20, %s23
      %p29 = scmp.eq.s32.totalorder %s10, 0
      %p30 = por %p28, %p29
      %p31 = scmp.ne.s32.totalorder %s20, %s23
      %p32 = scmp.eq.s32.totalorder %s15, 1
      %p33 = por %p31, %p32
      %p34 = scmp.ne.s32.totalorder %s23, %s24
      %p35 = scmp.eq.s32.totalorder %s15, 0
      %p36 = por %p34, %p35
      %p37 = scmp.ne.s32.totalorder %s23, %s24
      %p38 = scmp.eq.s32.totalorder %s16, 1
      %p39 = por %p37, %p38
      %p41 = scmp.ne.s32.totalorder %s24, %s40
      %p42 = scmp.eq.s32.totalorder %s16, 0
      %p43 = por %p41, %p42
      %s44 = ssub.s32 %s10, %s17
      %p45 = scmp.eq.s32.totalorder %s44, 0
      %s47 = sadd.s32 %s46, 1
      %s48 = scalar_select %p45, %s46, %s47
      %p51 = pneg %p45
      %p52 = scmp.eq.s32.totalorder %s10, 1
      %p53 = por %p51, %p52
      %p54 = scmp.ne.s32.totalorder %s46, %s49
      %p55 = scmp.eq.s32.totalorder %s10, 0
      %p56 = por %p54, %p55
      %p57 = scmp.ne.s32.totalorder %s46, %s49
      %p58 = scmp.eq.s32.totalorder %s15, 1
      %p59 = por %p57, %p58
      %p60 = scmp.ne.s32.totalorder %s49, %s50
      %p61 = scmp.eq.s32.totalorder %s15, 0
      %p62 = por %p60, %p61
      %p63 = scmp.ne.s32.totalorder %s49, %s50
      %p64 = scmp.eq.s32.totalorder %s16, 1
      %p65 = por %p63, %p64
      %p67 = scmp.ne.s32.totalorder %s50, %s66
      %p68 = scmp.eq.s32.totalorder %s16, 0
      %p69 = por %p67, %p68
      %p70 = scmp.le.s32.totalorder 1, %s10
      %p71 = scmp.lt.s32.totalorder %s10, 3
      %p72 = pnand %p70, %p71
      %p73 = pneg %p72
      // Predicated region
      $region9: #{branch_1_fun.1} parent=5 // pred_check
        _
      $region10: #{branch_1_fun.1} parent=5 // pred_check_branch
        %75 = sbr.rel (%p72) target = $region12
      $region11: #{branch_1_fun.1} parent=5 // pred_region
        %s76 = ssub.s32 %s10, 1
      $region12: #{branch_1_fun.1} parent=5 // pred_fallthru
        _
      %p77 = scmp.lt.s32.totalorder %s10, 2
      // Predicated region
      $region13: #{branch_1_fun.1} parent=5 // pred_check
        %p78 = pneg %p77
      $region14: #{branch_1_fun.1} parent=5 // pred_check_branch
        %80 = sbr.rel (%p78) target = $region16
      $region15: #{branch_1_fun.1} parent=5 // pred_region
        // Predicated region
        $region17: #{branch_1_fun.1} parent=15 // pred_check
          %p81 = pneg %p30
        $region18: #{branch_1_fun.1} parent=15 // pred_check_branch
          %83 = sbr.rel (%p81) target = $region20
        $region19: #{branch_1_fun.1} parent=15 // pred_region
          %s84 = smul.u32 84, %s10
          %p85 = scmp.lt.s32.totalorder %s84, 167
          %s86 = scalar_select %p85, %s84, 167
          %s87 = smul.addr %s86, 2
          %s88 = smul.addr %s87, 8
          %s89 = scalar_lea.vmem %s0, %s88
          %s90 = smul.u32 84, %s10
        $region20: #{branch_1_fun.1} parent=15 // pred_fallthru
          _
      $region16: #{branch_1_fun.1} parent=5 // pred_fallthru
        _
      %p91 = scmp.le.s32.totalorder 1, %s10
      %p92 = scmp.lt.s32.totalorder %s10, 3
      %p93 = pnand %p91, %p92
      %p94 = pneg %p93
      // Predicated region
      $region21: #{branch_1_fun.1} parent=5 // pred_check
        _
      $region22: #{branch_1_fun.1} parent=5 // pred_check_branch
        %96 = sbr.rel (%p93) target = $region24
      $region23: #{branch_1_fun.1} parent=5 // pred_region
        %s97 = ssub.s32 %s10, 1
        %s98 = smul.u32 84, %s15
        %p99 = scmp.lt.s32.totalorder %s98, 167
        %s100 = scalar_select %p99, %s98, 167
        %s101 = smul.addr %s100, 2
        %s102 = smul.addr %s101, 8
        %s103 = scalar_lea.vmem %s0, %s102
        %p104 = pneg %p36
        %p105 = pneg %p33
        %p106 = pneg %p62
        %p107 = pneg %p59
        %s108 = sand.u32 %s49, 1
        %s109 = scalar_lea.sflag [#allocation3], %s108
        %s110 = sand.u32 %s49, 1
        %s111 = smul.addr %s110, 1344
        %s112 = scalar_lea.vmem [#allocation2], %s111
        %s113 = smul.u32 84, %s15
        %p114 = scmp.lt.s32.totalorder %s113, 167
        %s115 = scalar_select %p114, %s113, 167
        %s116 = smul.addr %s115, 2
        %s117 = smul.addr %s116, 8
        %s118 = scalar_lea.vmem %s0, %s117
        %s119 = smul.u32 84, %s15
        %s120 = smul.u32 84, %s15
        %v121 = vld [vmem:[%s118] sm:$0xff]
        %v122 = vld [vmem:[%s118 + $0x8] sm:$0xff]
        %v123 = vld [vmem:[%s118 + $0x10] sm:$0xff]
        %v124 = vld [vmem:[%s118 + $0x18] sm:$0xff]
        %v125 = vld [vmem:[%s118 + $0x20] sm:$0xff]
        %v126 = vld [vmem:[%s118 + $0x28] sm:$0xff]
        %v127 = vld [vmem:[%s118 + $0x30] sm:$0xff]
        %v128 = vld [vmem:[%s118 + $0x38] sm:$0xff]
        %v129 = vld [vmem:[%s118 + $0x40] sm:$0xff]
        %v130 = vld [vmem:[%s118 + $0x48] sm:$0xff]
        %v131 = vld [vmem:[%s118 + $0x50] sm:$0xff]
        %v132 = vld [vmem:[%s118 + $0x58] sm:$0xff]
        %v133 = vld [vmem:[%s118 + $0x60] sm:$0xff]
        %v134 = vld [vmem:[%s118 + $0x68] sm:$0xff]
        %v135 = vld [vmem:[%s118 + $0x70] sm:$0xff]
        %v136 = vld [vmem:[%s118 + $0x78] sm:$0xff]
        %v137 = vld [vmem:[%s118 + $0x80] sm:$0xff]
        %v138 = vld [vmem:[%s118 + $0x88] sm:$0xff]
        %v139 = vld [vmem:[%s118 + $0x90] sm:$0xff]
        %v140 = vld [vmem:[%s118 + $0x98] sm:$0xff]
        %v141 = vld [vmem:[%s118 + $0xa0] sm:$0xff]
        %v142 = vld [vmem:[%s118 + $0xa8] sm:$0xff]
        %v143 = vld [vmem:[%s118 + $0xb0] sm:$0xff]
        %v144 = vld [vmem:[%s118 + $0xb8] sm:$0xff]
        %v145 = vld [vmem:[%s118 + $0xc0] sm:$0xff]
        %v146 = vld [vmem:[%s118 + $0xc8] sm:$0xff]
        %v147 = vld [vmem:[%s118 + $0xd0] sm:$0xff]
        %v148 = vld [vmem:[%s118 + $0xd8] sm:$0xff]
        %v149 = vld [vmem:[%s118 + $0xe0] sm:$0xff]
        %v150 = vld [vmem:[%s118 + $0xe8] sm:$0xff]
        %v151 = vld [vmem:[%s118 + $0xf0] sm:$0xff]
        %v152 = vld [vmem:[%s118 + $0xf8] sm:$0xff]
        %v153 = vld [vmem:[%s118 + $0x100] sm:$0xff]
        %v154 = vld [vmem:[%s118 + $0x108] sm:$0xff]
        %v155 = vld [vmem:[%s118 + $0x110] sm:$0xff]
        %v156 = vld [vmem:[%s118 + $0x118] sm:$0xff]
        %v157 = vld [vmem:[%s118 + $0x120] sm:$0xff]
        %v158 = vld [vmem:[%s118 + $0x128] sm:$0xff]
        %v159 = vld [vmem:[%s118 + $0x130] sm:$0xff]
        %v160 = vld [vmem:[%s118 + $0x138] sm:$0xff]
        %v161 = vld [vmem:[%s118 + $0x140] sm:$0xff]
        %v162 = vld [vmem:[%s118 + $0x148] sm:$0xff]
        %v163 = vld [vmem:[%s118 + $0x150] sm:$0xff]
        %v164 = vld [vmem:[%s118 + $0x158] sm:$0xff]
        %v165 = vld [vmem:[%s118 + $0x160] sm:$0xff]
        %v166 = vld [vmem:[%s118 + $0x168] sm:$0xff]
        %v167 = vld [vmem:[%s118 + $0x170] sm:$0xff]
        %v168 = vld [vmem:[%s118 + $0x178] sm:$0xff]
        %v169 = vld [vmem:[%s118 + $0x180] sm:$0xff]
        %v170 = vld [vmem:[%s118 + $0x188] sm:$0xff]
        %v171 = vld [vmem:[%s118 + $0x190] sm:$0xff]
        %v172 = vld [vmem:[%s118 + $0x198] sm:$0xff]
        %v173 = vld [vmem:[%s118 + $0x1a0] sm:$0xff]
        %v174 = vld [vmem:[%s118 + $0x1a8] sm:$0xff]
        %v175 = vld [vmem:[%s118 + $0x1b0] sm:$0xff]
        %v176 = vld [vmem:[%s118 + $0x1b8] sm:$0xff]
        %v177 = vld [vmem:[%s118 + $0x1c0] sm:$0xff]
        %v178 = vld [vmem:[%s118 + $0x1c8] sm:$0xff]
        %v179 = vld [vmem:[%s118 + $0x1d0] sm:$0xff]
        %v180 = vld [vmem:[%s118 + $0x1d8] sm:$0xff]
        %v181 = vld [vmem:[%s118 + $0x1e0] sm:$0xff]
        %v182 = vld [vmem:[%s118 + $0x1e8] sm:$0xff]
        %v183 = vld [vmem:[%s118 + $0x1f0] sm:$0xff]
        %v184 = vld [vmem:[%s118 + $0x1f8] sm:$0xff]
        %v185 = vld [vmem:[%s118 + $0x200] sm:$0xff]
        %v186 = vld [vmem:[%s118 + $0x208] sm:$0xff]
        %v187 = vld [vmem:[%s118 + $0x210] sm:$0xff]
        %v188 = vld [vmem:[%s118 + $0x218] sm:$0xff]
        %v189 = vld [vmem:[%s118 + $0x220] sm:$0xff]
        %v190 = vld [vmem:[%s118 + $0x228] sm:$0xff]
        %v191 = vld [vmem:[%s118 + $0x230] sm:$0xff]
        %v192 = vld [vmem:[%s118 + $0x238] sm:$0xff]
        %v193 = vld [vmem:[%s118 + $0x240] sm:$0xff]
        %v194 = vld [vmem:[%s118 + $0x248] sm:$0xff]
        %v195 = vld [vmem:[%s118 + $0x250] sm:$0xff]
        %v196 = vld [vmem:[%s118 + $0x258] sm:$0xff]
        %v197 = vld [vmem:[%s118 + $0x260] sm:$0xff]
        %v198 = vld [vmem:[%s118 + $0x268] sm:$0xff]
        %v199 = vld [vmem:[%s118 + $0x270] sm:$0xff]
        %v200 = vld [vmem:[%s118 + $0x278] sm:$0xff]
        %v201 = vld [vmem:[%s118 + $0x280] sm:$0xff]
        %v202 = vld [vmem:[%s118 + $0x288] sm:$0xff]
        %v203 = vld [vmem:[%s118 + $0x290] sm:$0xff]
        %v204 = vld [vmem:[%s118 + $0x298] sm:$0xff]
        %v205 = vld [vmem:[%s118 + $0x2a0] sm:$0xff]
        %v206 = vld [vmem:[%s118 + $0x2a8] sm:$0xff]
        %v207 = vld [vmem:[%s118 + $0x2b0] sm:$0xff]
        %v208 = vld [vmem:[%s118 + $0x2b8] sm:$0xff]
        %v209 = vld [vmem:[%s118 + $0x2c0] sm:$0xff]
        %v210 = vld [vmem:[%s118 + $0x2c8] sm:$0xff]
        %v211 = vld [vmem:[%s118 + $0x2d0] sm:$0xff]
        %v212 = vld [vmem:[%s118 + $0x2d8] sm:$0xff]
        %v213 = vld [vmem:[%s118 + $0x2e0] sm:$0xff]
        %v214 = vld [vmem:[%s118 + $0x2e8] sm:$0xff]
        %v215 = vld [vmem:[%s118 + $0x2f0] sm:$0xff]
        %v216 = vld [vmem:[%s118 + $0x2f8] sm:$0xff]
        %v217 = vld [vmem:[%s118 + $0x300] sm:$0xff]
        %v218 = vld [vmem:[%s118 + $0x308] sm:$0xff]
        %v219 = vld [vmem:[%s118 + $0x310] sm:$0xff]
        %v220 = vld [vmem:[%s118 + $0x318] sm:$0xff]
        %v221 = vld [vmem:[%s118 + $0x320] sm:$0xff]
        %v222 = vld [vmem:[%s118 + $0x328] sm:$0xff]
        %v223 = vld [vmem:[%s118 + $0x330] sm:$0xff]
        %v224 = vld [vmem:[%s118 + $0x338] sm:$0xff]
        %v225 = vld [vmem:[%s118 + $0x340] sm:$0xff]
        %v226 = vld [vmem:[%s118 + $0x348] sm:$0xff]
        %v227 = vld [vmem:[%s118 + $0x350] sm:$0xff]
        %v228 = vld [vmem:[%s118 + $0x358] sm:$0xff]
        %v229 = vld [vmem:[%s118 + $0x360] sm:$0xff]
        %v230 = vld [vmem:[%s118 + $0x368] sm:$0xff]
        %v231 = vld [vmem:[%s118 + $0x370] sm:$0xff]
        %v232 = vld [vmem:[%s118 + $0x378] sm:$0xff]
        %v233 = vld [vmem:[%s118 + $0x380] sm:$0xff]
        %v234 = vld [vmem:[%s118 + $0x388] sm:$0xff]
        %v235 = vld [vmem:[%s118 + $0x390] sm:$0xff]
        %v236 = vld [vmem:[%s118 + $0x398] sm:$0xff]
        %v237 = vld [vmem:[%s118 + $0x3a0] sm:$0xff]
        %v238 = vld [vmem:[%s118 + $0x3a8] sm:$0xff]
        %v239 = vld [vmem:[%s118 + $0x3b0] sm:$0xff]
        %v240 = vld [vmem:[%s118 + $0x3b8] sm:$0xff]
        %v241 = vld [vmem:[%s118 + $0x3c0] sm:$0xff]
        %v242 = vld [vmem:[%s118 + $0x3c8] sm:$0xff]
        %v243 = vld [vmem:[%s118 + $0x3d0] sm:$0xff]
        %v244 = vld [vmem:[%s118 + $0x3d8] sm:$0xff]
        %v245 = vld [vmem:[%s118 + $0x3e0] sm:$0xff]
        %v246 = vld [vmem:[%s118 + $0x3e8] sm:$0xff]
        %v247 = vld [vmem:[%s118 + $0x3f0] sm:$0xff]
        %v248 = vld [vmem:[%s118 + $0x3f8] sm:$0xff]
        %v249 = vld [vmem:[%s118 + $0x400] sm:$0xff]
        %v250 = vld [vmem:[%s118 + $0x408] sm:$0xff]
        %v251 = vld [vmem:[%s118 + $0x410] sm:$0xff]
        %v252 = vld [vmem:[%s118 + $0x418] sm:$0xff]
        %v253 = vld [vmem:[%s118 + $0x420] sm:$0xff]
        %v254 = vld [vmem:[%s118 + $0x428] sm:$0xff]
        %v255 = vld [vmem:[%s118 + $0x430] sm:$0xff]
        %v256 = vld [vmem:[%s118 + $0x438] sm:$0xff]
        %v257 = vld [vmem:[%s118 + $0x440] sm:$0xff]
        %v258 = vld [vmem:[%s118 + $0x448] sm:$0xff]
        %v259 = vld [vmem:[%s118 + $0x450] sm:$0xff]
        %v260 = vld [vmem:[%s118 + $0x458] sm:$0xff]
        %v261 = vld [vmem:[%s118 + $0x460] sm:$0xff]
        %v262 = vld [vmem:[%s118 + $0x468] sm:$0xff]
        %v263 = vld [vmem:[%s118 + $0x470] sm:$0xff]
        %v264 = vld [vmem:[%s118 + $0x478] sm:$0xff]
        %v265 = vld [vmem:[%s118 + $0x480] sm:$0xff]
        %v266 = vld [vmem:[%s118 + $0x488] sm:$0xff]
        %v267 = vld [vmem:[%s118 + $0x490] sm:$0xff]
        %v268 = vld [vmem:[%s118 + $0x498] sm:$0xff]
        %v269 = vld [vmem:[%s118 + $0x4a0] sm:$0xff]
        %v270 = vld [vmem:[%s118 + $0x4a8] sm:$0xff]
        %v271 = vld [vmem:[%s118 + $0x4b0] sm:$0xff]
        %v272 = vld [vmem:[%s118 + $0x4b8] sm:$0xff]
        %v273 = vld [vmem:[%s118 + $0x4c0] sm:$0xff]
        %v274 = vld [vmem:[%s118 + $0x4c8] sm:$0xff]
        %v275 = vld [vmem:[%s118 + $0x4d0] sm:$0xff]
        %v276 = vld [vmem:[%s118 + $0x4d8] sm:$0xff]
        %v277 = vld [vmem:[%s118 + $0x4e0] sm:$0xff]
        %v278 = vld [vmem:[%s118 + $0x4e8] sm:$0xff]
        %v279 = vld [vmem:[%s118 + $0x4f0] sm:$0xff]
        %v280 = vld [vmem:[%s118 + $0x4f8] sm:$0xff]
        %v281 = vld [vmem:[%s118 + $0x500] sm:$0xff]
        %v282 = vld [vmem:[%s118 + $0x508] sm:$0xff]
        %v283 = vld [vmem:[%s118 + $0x510] sm:$0xff]
        %v284 = vld [vmem:[%s118 + $0x518] sm:$0xff]
        %v285 = vld [vmem:[%s118 + $0x520] sm:$0xff]
        %v286 = vld [vmem:[%s118 + $0x528] sm:$0xff]
        %v287 = vld [vmem:[%s118 + $0x530] sm:$0xff]
        %v288 = vld [vmem:[%s118 + $0x538] sm:$0xff]
        %v289 = vmul.f32 %v121, 1.2
        %v290 = vmul.f32 %v122, 1.2
        %v291 = vmul.f32 %v123, 1.2
        %v292 = vmul.f32 %v124, 1.2
        %v293 = vmul.f32 %v125, 1.2
        %v294 = vmul.f32 %v126, 1.2
        %v295 = vmul.f32 %v127, 1.2
        %v296 = vmul.f32 %v128, 1.2
        %v297 = vmul.f32 %v129, 1.2
        %v298 = vmul.f32 %v130, 1.2
        %v299 = vmul.f32 %v131, 1.2
        %v300 = vmul.f32 %v132, 1.2
        %v301 = vmul.f32 %v133, 1.2
        %v302 = vmul.f32 %v134, 1.2
        %v303 = vmul.f32 %v135, 1.2
        %v304 = vmul.f32 %v136, 1.2
        %v305 = vmul.f32 %v137, 1.2
        %v306 = vmul.f32 %v138, 1.2
        %v307 = vmul.f32 %v139, 1.2
        %v308 = vmul.f32 %v140, 1.2
        %v309 = vmul.f32 %v141, 1.2
        %v310 = vmul.f32 %v142, 1.2
        %v311 = vmul.f32 %v143, 1.2
        %v312 = vmul.f32 %v144, 1.2
        %v313 = vmul.f32 %v145, 1.2
        %v314 = vmul.f32 %v146, 1.2
        %v315 = vmul.f32 %v147, 1.2
        %v316 = vmul.f32 %v148, 1.2
        %v317 = vmul.f32 %v149, 1.2
        %v318 = vmul.f32 %v150, 1.2
        %v319 = vmul.f32 %v151, 1.2
        %v320 = vmul.f32 %v152, 1.2
        %v321 = vmul.f32 %v153, 1.2
        %v322 = vmul.f32 %v154, 1.2
        %v323 = vmul.f32 %v155, 1.2
        %v324 = vmul.f32 %v156, 1.2
        %v325 = vmul.f32 %v157, 1.2
        %v326 = vmul.f32 %v158, 1.2
        %v327 = vmul.f32 %v159, 1.2
        %v328 = vmul.f32 %v160, 1.2
        %v329 = vmul.f32 %v161, 1.2
        %v330 = vmul.f32 %v162, 1.2
        %v331 = vmul.f32 %v163, 1.2
        %v332 = vmul.f32 %v164, 1.2
        %v333 = vmul.f32 %v165, 1.2
        %v334 = vmul.f32 %v166, 1.2
        %v335 = vmul.f32 %v167, 1.2
        %v336 = vmul.f32 %v168, 1.2
        %v337 = vmul.f32 %v169, 1.2
        %v338 = vmul.f32 %v170, 1.2
        %v339 = vmul.f32 %v171, 1.2
        %v340 = vmul.f32 %v172, 1.2
        %v341 = vmul.f32 %v173, 1.2
        %v342 = vmul.f32 %v174, 1.2
        %v343 = vmul.f32 %v175, 1.2
        %v344 = vmul.f32 %v176, 1.2
        %v345 = vmul.f32 %v177, 1.2
        %v346 = vmul.f32 %v178, 1.2
        %v347 = vmul.f32 %v179, 1.2
        %v348 = vmul.f32 %v180, 1.2
        %v349 = vmul.f32 %v181, 1.2
        %v350 = vmul.f32 %v182, 1.2
        %v351 = vmul.f32 %v183, 1.2
        %v352 = vmul.f32 %v184, 1.2
        %v353 = vmul.f32 %v185, 1.2
        %v354 = vmul.f32 %v186, 1.2
        %v355 = vmul.f32 %v187, 1.2
        %v356 = vmul.f32 %v188, 1.2
        %v357 = vmul.f32 %v189, 1.2
        %v358 = vmul.f32 %v190, 1.2
        %v359 = vmul.f32 %v191, 1.2
        %v360 = vmul.f32 %v192, 1.2
        %v361 = vmul.f32 %v193, 1.2
        %v362 = vmul.f32 %v194, 1.2
        %v363 = vmul.f32 %v195, 1.2
        %v364 = vmul.f32 %v196, 1.2
        %v365 = vmul.f32 %v197, 1.2
        %v366 = vmul.f32 %v198, 1.2
        %v367 = vmul.f32 %v199, 1.2
        %v368 = vmul.f32 %v200, 1.2
        %v369 = vmul.f32 %v201, 1.2
        %v370 = vmul.f32 %v202, 1.2
        %v371 = vmul.f32 %v203, 1.2
        %v372 = vmul.f32 %v204, 1.2
        %v373 = vmul.f32 %v205, 1.2
        %v374 = vmul.f32 %v206, 1.2
        %v375 = vmul.f32 %v207, 1.2
        %v376 = vmul.f32 %v208, 1.2
        %v377 = vmul.f32 %v209, 1.2
        %v378 = vmul.f32 %v210, 1.2
        %v379 = vmul.f32 %v211, 1.2
        %v380 = vmul.f32 %v212, 1.2
        %v381 = vmul.f32 %v213, 1.2
        %v382 = vmul.f32 %v214, 1.2
        %v383 = vmul.f32 %v215, 1.2
        %v384 = vmul.f32 %v216, 1.2
        %v385 = vmul.f32 %v217, 1.2
        %v386 = vmul.f32 %v218, 1.2
        %v387 = vmul.f32 %v219, 1.2
        %v388 = vmul.f32 %v220, 1.2
        %v389 = vmul.f32 %v221, 1.2
        %v390 = vmul.f32 %v222, 1.2
        %v391 = vmul.f32 %v223, 1.2
        %v392 = vmul.f32 %v224, 1.2
        %v393 = vmul.f32 %v225, 1.2
        %v394 = vmul.f32 %v226, 1.2
        %v395 = vmul.f32 %v227, 1.2
        %v396 = vmul.f32 %v228, 1.2
        %v397 = vmul.f32 %v229, 1.2
        %v398 = vmul.f32 %v230, 1.2
        %v399 = vmul.f32 %v231, 1.2
        %v400 = vmul.f32 %v232, 1.2
        %v401 = vmul.f32 %v233, 1.2
        %v402 = vmul.f32 %v234, 1.2
        %v403 = vmul.f32 %v235, 1.2
        %v404 = vmul.f32 %v236, 1.2
        %v405 = vmul.f32 %v237, 1.2
        %v406 = vmul.f32 %v238, 1.2
        %v407 = vmul.f32 %v239, 1.2
        %v408 = vmul.f32 %v240, 1.2
        %v409 = vmul.f32 %v241, 1.2
        %v410 = vmul.f32 %v242, 1.2
        %v411 = vmul.f32 %v243, 1.2
        %v412 = vmul.f32 %v244, 1.2
        %v413 = vmul.f32 %v245, 1.2
        %v414 = vmul.f32 %v246, 1.2
        %v415 = vmul.f32 %v247, 1.2
        %v416 = vmul.f32 %v248, 1.2
        %v417 = vmul.f32 %v249, 1.2
        %v418 = vmul.f32 %v250, 1.2
        %v419 = vmul.f32 %v251, 1.2
        %v420 = vmul.f32 %v252, 1.2
        %v421 = vmul.f32 %v253, 1.2
        %v422 = vmul.f32 %v254, 1.2
        %v423 = vmul.f32 %v255, 1.2
        %v424 = vmul.f32 %v256, 1.2
        %v425 = vmul.f32 %v257, 1.2
        %v426 = vmul.f32 %v258, 1.2
        %v427 = vmul.f32 %v259, 1.2
        %v428 = vmul.f32 %v260, 1.2
        %v429 = vmul.f32 %v261, 1.2
        %v430 = vmul.f32 %v262, 1.2
        %v431 = vmul.f32 %v263, 1.2
        %v432 = vmul.f32 %v264, 1.2
        %v433 = vmul.f32 %v265, 1.2
        %v434 = vmul.f32 %v266, 1.2
        %v435 = vmul.f32 %v267, 1.2
        %v436 = vmul.f32 %v268, 1.2
        %v437 = vmul.f32 %v269, 1.2
        %v438 = vmul.f32 %v270, 1.2
        %v439 = vmul.f32 %v271, 1.2
        %v440 = vmul.f32 %v272, 1.2
        %v441 = vmul.f32 %v273, 1.2
        %v442 = vmul.f32 %v274, 1.2
        %v443 = vmul.f32 %v275, 1.2
        %v444 = vmul.f32 %v276, 1.2
        %v445 = vmul.f32 %v277, 1.2
        %v446 = vmul.f32 %v278, 1.2
        %v447 = vmul.f32 %v279, 1.2
        %v448 = vmul.f32 %v280, 1.2
        %v449 = vmul.f32 %v281, 1.2
        %v450 = vmul.f32 %v282, 1.2
        %v451 = vmul.f32 %v283, 1.2
        %v452 = vmul.f32 %v284, 1.2
        %v453 = vmul.f32 %v285, 1.2
        %v454 = vmul.f32 %v286, 1.2
        %v455 = vmul.f32 %v287, 1.2
        %v456 = vmul.f32 %v288, 1.2
        %v457 = vadd.f32 %v289, 0.1
        %v458 = vadd.f32 %v290, 0.1
        %v459 = vadd.f32 %v291, 0.1
        %v460 = vadd.f32 %v292, 0.1
        %v461 = vadd.f32 %v293, 0.1
        %v462 = vadd.f32 %v294, 0.1
        %v463 = vadd.f32 %v295, 0.1
        %v464 = vadd.f32 %v296, 0.1
        %v465 = vadd.f32 %v297, 0.1
        %v466 = vadd.f32 %v298, 0.1
        %v467 = vadd.f32 %v299, 0.1
        %v468 = vadd.f32 %v300, 0.1
        %v469 = vadd.f32 %v301, 0.1
        %v470 = vadd.f32 %v302, 0.1
        %v471 = vadd.f32 %v303, 0.1
        %v472 = vadd.f32 %v304, 0.1
        %v473 = vadd.f32 %v305, 0.1
        %v474 = vadd.f32 %v306, 0.1
        %v475 = vadd.f32 %v307, 0.1
        %v476 = vadd.f32 %v308, 0.1
        %v477 = vadd.f32 %v309, 0.1
        %v478 = vadd.f32 %v310, 0.1
        %v479 = vadd.f32 %v311, 0.1
        %v480 = vadd.f32 %v312, 0.1
        %v481 = vadd.f32 %v313, 0.1
        %v482 = vadd.f32 %v314, 0.1
        %v483 = vadd.f32 %v315, 0.1
        %v484 = vadd.f32 %v316, 0.1
        %v485 = vadd.f32 %v317, 0.1
        %v486 = vadd.f32 %v318, 0.1
        %v487 = vadd.f32 %v319, 0.1
        %v488 = vadd.f32 %v320, 0.1
        %v489 = vadd.f32 %v321, 0.1
        %v490 = vadd.f32 %v322, 0.1
        %v491 = vadd.f32 %v323, 0.1
        %v492 = vadd.f32 %v324, 0.1
        %v493 = vadd.f32 %v325, 0.1
        %v494 = vadd.f32 %v326, 0.1
        %v495 = vadd.f32 %v327, 0.1
        %v496 = vadd.f32 %v328, 0.1
        %v497 = vadd.f32 %v329, 0.1
        %v498 = vadd.f32 %v330, 0.1
        %v499 = vadd.f32 %v331, 0.1
        %v500 = vadd.f32 %v332, 0.1
        %v501 = vadd.f32 %v333, 0.1
        %v502 = vadd.f32 %v334, 0.1
        %v503 = vadd.f32 %v335, 0.1
        %v504 = vadd.f32 %v336, 0.1
        %v505 = vadd.f32 %v337, 0.1
        %v506 = vadd.f32 %v338, 0.1
        %v507 = vadd.f32 %v339, 0.1
        %v508 = vadd.f32 %v340, 0.1
        %v509 = vadd.f32 %v341, 0.1
        %v510 = vadd.f32 %v342, 0.1
        %v511 = vadd.f32 %v343, 0.1
        %v512 = vadd.f32 %v344, 0.1
        %v513 = vadd.f32 %v345, 0.1
        %v514 = vadd.f32 %v346, 0.1
        %v515 = vadd.f32 %v347, 0.1
        %v516 = vadd.f32 %v348, 0.1
        %v517 = vadd.f32 %v349, 0.1
        %v518 = vadd.f32 %v350, 0.1
        %v519 = vadd.f32 %v351, 0.1
        %v520 = vadd.f32 %v352, 0.1
        %v521 = vadd.f32 %v353, 0.1
        %v522 = vadd.f32 %v354, 0.1
        %v523 = vadd.f32 %v355, 0.1
        %v524 = vadd.f32 %v356, 0.1
        %v525 = vadd.f32 %v357, 0.1
        %v526 = vadd.f32 %v358, 0.1
        %v527 = vadd.f32 %v359, 0.1
        %v528 = vadd.f32 %v360, 0.1
        %v529 = vadd.f32 %v361, 0.1
        %v530 = vadd.f32 %v362, 0.1
        %v531 = vadd.f32 %v363, 0.1
        %v532 = vadd.f32 %v364, 0.1
        %v533 = vadd.f32 %v365, 0.1
        %v534 = vadd.f32 %v366, 0.1
        %v535 = vadd.f32 %v367, 0.1
        %v536 = vadd.f32 %v368, 0.1
        %v537 = vadd.f32 %v369, 0.1
        %v538 = vadd.f32 %v370, 0.1
        %v539 = vadd.f32 %v371, 0.1
        %v540 = vadd.f32 %v372, 0.1
        %v541 = vadd.f32 %v373, 0.1
        %v542 = vadd.f32 %v374, 0.1
        %v543 = vadd.f32 %v375, 0.1
        %v544 = vadd.f32 %v376, 0.1
        %v545 = vadd.f32 %v377, 0.1
        %v546 = vadd.f32 %v378, 0.1
        %v547 = vadd.f32 %v379, 0.1
        %v548 = vadd.f32 %v380, 0.1
        %v549 = vadd.f32 %v381, 0.1
        %v550 = vadd.f32 %v382, 0.1
        %v551 = vadd.f32 %v383, 0.1
        %v552 = vadd.f32 %v384, 0.1
        %v553 = vadd.f32 %v385, 0.1
        %v554 = vadd.f32 %v386, 0.1
        %v555 = vadd.f32 %v387, 0.1
        %v556 = vadd.f32 %v388, 0.1
        %v557 = vadd.f32 %v389, 0.1
        %v558 = vadd.f32 %v390, 0.1
        %v559 = vadd.f32 %v391, 0.1
        %v560 = vadd.f32 %v392, 0.1
        %v561 = vadd.f32 %v393, 0.1
        %v562 = vadd.f32 %v394, 0.1
        %v563 = vadd.f32 %v395, 0.1
        %v564 = vadd.f32 %v396, 0.1
        %v565 = vadd.f32 %v397, 0.1
        %v566 = vadd.f32 %v398, 0.1
        %v567 = vadd.f32 %v399, 0.1
        %v568 = vadd.f32 %v400, 0.1
        %v569 = vadd.f32 %v401, 0.1
        %v570 = vadd.f32 %v402, 0.1
        %v571 = vadd.f32 %v403, 0.1
        %v572 = vadd.f32 %v404, 0.1
        %v573 = vadd.f32 %v405, 0.1
        %v574 = vadd.f32 %v406, 0.1
        %v575 = vadd.f32 %v407, 0.1
        %v576 = vadd.f32 %v408, 0.1
        %v577 = vadd.f32 %v409, 0.1
        %v578 = vadd.f32 %v410, 0.1
        %v579 = vadd.f32 %v411, 0.1
        %v580 = vadd.f32 %v412, 0.1
        %v581 = vadd.f32 %v413, 0.1
        %v582 = vadd.f32 %v414, 0.1
        %v583 = vadd.f32 %v415, 0.1
        %v584 = vadd.f32 %v416, 0.1
        %v585 = vadd.f32 %v417, 0.1
        %v586 = vadd.f32 %v418, 0.1
        %v587 = vadd.f32 %v419, 0.1
        %v588 = vadd.f32 %v420, 0.1
        %v589 = vadd.f32 %v421, 0.1
        %v590 = vadd.f32 %v422, 0.1
        %v591 = vadd.f32 %v423, 0.1
        %v592 = vadd.f32 %v424, 0.1
        %v593 = vadd.f32 %v425, 0.1
        %v594 = vadd.f32 %v426, 0.1
        %v595 = vadd.f32 %v427, 0.1
        %v596 = vadd.f32 %v428, 0.1
        %v597 = vadd.f32 %v429, 0.1
        %v598 = vadd.f32 %v430, 0.1
        %v599 = vadd.f32 %v431, 0.1
        %v600 = vadd.f32 %v432, 0.1
        %v601 = vadd.f32 %v433, 0.1
        %v602 = vadd.f32 %v434, 0.1
        %v603 = vadd.f32 %v435, 0.1
        %v604 = vadd.f32 %v436, 0.1
        %v605 = vadd.f32 %v437, 0.1
        %v606 = vadd.f32 %v438, 0.1
        %v607 = vadd.f32 %v439, 0.1
        %v608 = vadd.f32 %v440, 0.1
        %v609 = vadd.f32 %v441, 0.1
        %v610 = vadd.f32 %v442, 0.1
        %v611 = vadd.f32 %v443, 0.1
        %v612 = vadd.f32 %v444, 0.1
        %v613 = vadd.f32 %v445, 0.1
        %v614 = vadd.f32 %v446, 0.1
        %v615 = vadd.f32 %v447, 0.1
        %v616 = vadd.f32 %v448, 0.1
        %v617 = vadd.f32 %v449, 0.1
        %v618 = vadd.f32 %v450, 0.1
        %v619 = vadd.f32 %v451, 0.1
        %v620 = vadd.f32 %v452, 0.1
        %v621 = vadd.f32 %v453, 0.1
        %v622 = vadd.f32 %v454, 0.1
        %v623 = vadd.f32 %v455, 0.1
        %v624 = vadd.f32 %v456, 0.1
        %v625 = vmax.f32 %v457, 0.0
        %v626 = vmax.f32 %v458, 0.0
        %v627 = vmax.f32 %v459, 0.0
        %v628 = vmax.f32 %v460, 0.0
        %v629 = vmax.f32 %v461, 0.0
        %v630 = vmax.f32 %v462, 0.0
        %v631 = vmax.f32 %v463, 0.0
        %v632 = vmax.f32 %v464, 0.0
        %v633 = vmax.f32 %v465, 0.0
        %v634 = vmax.f32 %v466, 0.0
        %v635 = vmax.f32 %v467, 0.0
        %v636 = vmax.f32 %v468, 0.0
        %v637 = vmax.f32 %v469, 0.0
        %v638 = vmax.f32 %v470, 0.0
        %v639 = vmax.f32 %v471, 0.0
        %v640 = vmax.f32 %v472, 0.0
        %v641 = vmax.f32 %v473, 0.0
        %v642 = vmax.f32 %v474, 0.0
        %v643 = vmax.f32 %v475, 0.0
        %v644 = vmax.f32 %v476, 0.0
        %v645 = vmax.f32 %v477, 0.0
        %v646 = vmax.f32 %v478, 0.0
        %v647 = vmax.f32 %v479, 0.0
        %v648 = vmax.f32 %v480, 0.0
        %v649 = vmax.f32 %v481, 0.0
        %v650 = vmax.f32 %v482, 0.0
        %v651 = vmax.f32 %v483, 0.0
        %v652 = vmax.f32 %v484, 0.0
        %v653 = vmax.f32 %v485, 0.0
        %v654 = vmax.f32 %v486, 0.0
        %v655 = vmax.f32 %v487, 0.0
        %v656 = vmax.f32 %v488, 0.0
        %v657 = vmax.f32 %v489, 0.0
        %v658 = vmax.f32 %v490, 0.0
        %v659 = vmax.f32 %v491, 0.0
        %v660 = vmax.f32 %v492, 0.0
        %v661 = vmax.f32 %v493, 0.0
        %v662 = vmax.f32 %v494, 0.0
        %v663 = vmax.f32 %v495, 0.0
        %v664 = vmax.f32 %v496, 0.0
        %v665 = vmax.f32 %v497, 0.0
        %v666 = vmax.f32 %v498, 0.0
        %v667 = vmax.f32 %v499, 0.0
        %v668 = vmax.f32 %v500, 0.0
        %v669 = vmax.f32 %v501, 0.0
        %v670 = vmax.f32 %v502, 0.0
        %v671 = vmax.f32 %v503, 0.0
        %v672 = vmax.f32 %v504, 0.0
        %v673 = vmax.f32 %v505, 0.0
        %v674 = vmax.f32 %v506, 0.0
        %v675 = vmax.f32 %v507, 0.0
        %v676 = vmax.f32 %v508, 0.0
        %v677 = vmax.f32 %v509, 0.0
        %v678 = vmax.f32 %v510, 0.0
        %v679 = vmax.f32 %v511, 0.0
        %v680 = vmax.f32 %v512, 0.0
        %v681 = vmax.f32 %v513, 0.0
        %v682 = vmax.f32 %v514, 0.0
        %v683 = vmax.f32 %v515, 0.0
        %v684 = vmax.f32 %v516, 0.0
        %v685 = vmax.f32 %v517, 0.0
        %v686 = vmax.f32 %v518, 0.0
        %v687 = vmax.f32 %v519, 0.0
        %v688 = vmax.f32 %v520, 0.0
        %v689 = vmax.f32 %v521, 0.0
        %v690 = vmax.f32 %v522, 0.0
        %v691 = vmax.f32 %v523, 0.0
        %v692 = vmax.f32 %v524, 0.0
        %v693 = vmax.f32 %v525, 0.0
        %v694 = vmax.f32 %v526, 0.0
        %v695 = vmax.f32 %v527, 0.0
        %v696 = vmax.f32 %v528, 0.0
        %v697 = vmax.f32 %v529, 0.0
        %v698 = vmax.f32 %v530, 0.0
        %v699 = vmax.f32 %v531, 0.0
        %v700 = vmax.f32 %v532, 0.0
        %v701 = vmax.f32 %v533, 0.0
        %v702 = vmax.f32 %v534, 0.0
        %v703 = vmax.f32 %v535, 0.0
        %v704 = vmax.f32 %v536, 0.0
        %v705 = vmax.f32 %v537, 0.0
        %v706 = vmax.f32 %v538, 0.0
        %v707 = vmax.f32 %v539, 0.0
        %v708 = vmax.f32 %v540, 0.0
        %v709 = vmax.f32 %v541, 0.0
        %v710 = vmax.f32 %v542, 0.0
        %v711 = vmax.f32 %v543, 0.0
        %v712 = vmax.f32 %v544, 0.0
        %v713 = vmax.f32 %v545, 0.0
        %v714 = vmax.f32 %v546, 0.0
        %v715 = vmax.f32 %v547, 0.0
        %v716 = vmax.f32 %v548, 0.0
        %v717 = vmax.f32 %v549, 0.0
        %v718 = vmax.f32 %v550, 0.0
        %v719 = vmax.f32 %v551, 0.0
        %v720 = vmax.f32 %v552, 0.0
        %v721 = vmax.f32 %v553, 0.0
        %v722 = vmax.f32 %v554, 0.0
        %v723 = vmax.f32 %v555, 0.0
        %v724 = vmax.f32 %v556, 0.0
        %v725 = vmax.f32 %v557, 0.0
        %v726 = vmax.f32 %v558, 0.0
        %v727 = vmax.f32 %v559, 0.0
        %v728 = vmax.f32 %v560, 0.0
        %v729 = vmax.f32 %v561, 0.0
        %v730 = vmax.f32 %v562, 0.0
        %v731 = vmax.f32 %v563, 0.0
        %v732 = vmax.f32 %v564, 0.0
        %v733 = vmax.f32 %v565, 0.0
        %v734 = vmax.f32 %v566, 0.0
        %v735 = vmax.f32 %v567, 0.0
        %v736 = vmax.f32 %v568, 0.0
        %v737 = vmax.f32 %v569, 0.0
        %v738 = vmax.f32 %v570, 0.0
        %v739 = vmax.f32 %v571, 0.0
        %v740 = vmax.f32 %v572, 0.0
        %v741 = vmax.f32 %v573, 0.0
        %v742 = vmax.f32 %v574, 0.0
        %v743 = vmax.f32 %v575, 0.0
        %v744 = vmax.f32 %v576, 0.0
        %v745 = vmax.f32 %v577, 0.0
        %v746 = vmax.f32 %v578, 0.0
        %v747 = vmax.f32 %v579, 0.0
        %v748 = vmax.f32 %v580, 0.0
        %v749 = vmax.f32 %v581, 0.0
        %v750 = vmax.f32 %v582, 0.0
        %v751 = vmax.f32 %v583, 0.0
        %v752 = vmax.f32 %v584, 0.0
        %v753 = vmax.f32 %v585, 0.0
        %v754 = vmax.f32 %v586, 0.0
        %v755 = vmax.f32 %v587, 0.0
        %v756 = vmax.f32 %v588, 0.0
        %v757 = vmax.f32 %v589, 0.0
        %v758 = vmax.f32 %v590, 0.0
        %v759 = vmax.f32 %v591, 0.0
        %v760 = vmax.f32 %v592, 0.0
        %v761 = vmax.f32 %v593, 0.0
        %v762 = vmax.f32 %v594, 0.0
        %v763 = vmax.f32 %v595, 0.0
        %v764 = vmax.f32 %v596, 0.0
        %v765 = vmax.f32 %v597, 0.0
        %v766 = vmax.f32 %v598, 0.0
        %v767 = vmax.f32 %v599, 0.0
        %v768 = vmax.f32 %v600, 0.0
        %v769 = vmax.f32 %v601, 0.0
        %v770 = vmax.f32 %v602, 0.0
        %v771 = vmax.f32 %v603, 0.0
        %v772 = vmax.f32 %v604, 0.0
        %v773 = vmax.f32 %v605, 0.0
        %v774 = vmax.f32 %v606, 0.0
        %v775 = vmax.f32 %v607, 0.0
        %v776 = vmax.f32 %v608, 0.0
        %v777 = vmax.f32 %v609, 0.0
        %v778 = vmax.f32 %v610, 0.0
        %v779 = vmax.f32 %v611, 0.0
        %v780 = vmax.f32 %v612, 0.0
        %v781 = vmax.f32 %v613, 0.0
        %v782 = vmax.f32 %v614, 0.0
        %v783 = vmax.f32 %v615, 0.0
        %v784 = vmax.f32 %v616, 0.0
        %v785 = vmax.f32 %v617, 0.0
        %v786 = vmax.f32 %v618, 0.0
        %v787 = vmax.f32 %v619, 0.0
        %v788 = vmax.f32 %v620, 0.0
        %v789 = vmax.f32 %v621, 0.0
        %v790 = vmax.f32 %v622, 0.0
        %v791 = vmax.f32 %v623, 0.0
        %v792 = vmax.f32 %v624, 0.0
        %v793 = vmin.f32 %v625, 1.0
        %v794 = vmin.f32 %v626, 1.0
        %v795 = vmin.f32 %v627, 1.0
        %v796 = vmin.f32 %v628, 1.0
        %v797 = vmin.f32 %v629, 1.0
        %v798 = vmin.f32 %v630, 1.0
        %v799 = vmin.f32 %v631, 1.0
        %v800 = vmin.f32 %v632, 1.0
        %v801 = vmin.f32 %v633, 1.0
        %v802 = vmin.f32 %v634, 1.0
        %v803 = vmin.f32 %v635, 1.0
        %v804 = vmin.f32 %v636, 1.0
        %v805 = vmin.f32 %v637, 1.0
        %v806 = vmin.f32 %v638, 1.0
        %v807 = vmin.f32 %v639, 1.0
        %v808 = vmin.f32 %v640, 1.0
        %v809 = vmin.f32 %v641, 1.0
        %v810 = vmin.f32 %v642, 1.0
        %v811 = vmin.f32 %v643, 1.0
        %v812 = vmin.f32 %v644, 1.0
        %v813 = vmin.f32 %v645, 1.0
        %v814 = vmin.f32 %v646, 1.0
        %v815 = vmin.f32 %v647, 1.0
        %v816 = vmin.f32 %v648, 1.0
        %v817 = vmin.f32 %v649, 1.0
        %v818 = vmin.f32 %v650, 1.0
        %v819 = vmin.f32 %v651, 1.0
        %v820 = vmin.f32 %v652, 1.0
        %v821 = vmin.f32 %v653, 1.0
        %v822 = vmin.f32 %v654, 1.0
        %v823 = vmin.f32 %v655, 1.0
        %v824 = vmin.f32 %v656, 1.0
        %v825 = vmin.f32 %v657, 1.0
        %v826 = vmin.f32 %v658, 1.0
        %v827 = vmin.f32 %v659, 1.0
        %v828 = vmin.f32 %v660, 1.0
        %v829 = vmin.f32 %v661, 1.0
        %v830 = vmin.f32 %v662, 1.0
        %v831 = vmin.f32 %v663, 1.0
        %v832 = vmin.f32 %v664, 1.0
        %v833 = vmin.f32 %v665, 1.0
        %v834 = vmin.f32 %v666, 1.0
        %v835 = vmin.f32 %v667, 1.0
        %v836 = vmin.f32 %v668, 1.0
        %v837 = vmin.f32 %v669, 1.0
        %v838 = vmin.f32 %v670, 1.0
        %v839 = vmin.f32 %v671, 1.0
        %v840 = vmin.f32 %v672, 1.0
        %v841 = vmin.f32 %v673, 1.0
        %v842 = vmin.f32 %v674, 1.0
        %v843 = vmin.f32 %v675, 1.0
        %v844 = vmin.f32 %v676, 1.0
        %v845 = vmin.f32 %v677, 1.0
        %v846 = vmin.f32 %v678, 1.0
        %v847 = vmin.f32 %v679, 1.0
        %v848 = vmin.f32 %v680, 1.0
        %v849 = vmin.f32 %v681, 1.0
        %v850 = vmin.f32 %v682, 1.0
        %v851 = vmin.f32 %v683, 1.0
        %v852 = vmin.f32 %v684, 1.0
        %v853 = vmin.f32 %v685, 1.0
        %v854 = vmin.f32 %v686, 1.0
        %v855 = vmin.f32 %v687, 1.0
        %v856 = vmin.f32 %v688, 1.0
        %v857 = vmin.f32 %v689, 1.0
        %v858 = vmin.f32 %v690, 1.0
        %v859 = vmin.f32 %v691, 1.0
        %v860 = vmin.f32 %v692, 1.0
        %v861 = vmin.f32 %v693, 1.0
        %v862 = vmin.f32 %v694, 1.0
        %v863 = vmin.f32 %v695, 1.0
        %v864 = vmin.f32 %v696, 1.0
        %v865 = vmin.f32 %v697, 1.0
        %v866 = vmin.f32 %v698, 1.0
        %v867 = vmin.f32 %v699, 1.0
        %v868 = vmin.f32 %v700, 1.0
        %v869 = vmin.f32 %v701, 1.0
        %v870 = vmin.f32 %v702, 1.0
        %v871 = vmin.f32 %v703, 1.0
        %v872 = vmin.f32 %v704, 1.0
        %v873 = vmin.f32 %v705, 1.0
        %v874 = vmin.f32 %v706, 1.0
        %v875 = vmin.f32 %v707, 1.0
        %v876 = vmin.f32 %v708, 1.0
        %v877 = vmin.f32 %v709, 1.0
        %v878 = vmin.f32 %v710, 1.0
        %v879 = vmin.f32 %v711, 1.0
        %v880 = vmin.f32 %v712, 1.0
        %v881 = vmin.f32 %v713, 1.0
        %v882 = vmin.f32 %v714, 1.0
        %v883 = vmin.f32 %v715, 1.0
        %v884 = vmin.f32 %v716, 1.0
        %v885 = vmin.f32 %v717, 1.0
        %v886 = vmin.f32 %v718, 1.0
        %v887 = vmin.f32 %v719, 1.0
        %v888 = vmin.f32 %v720, 1.0
        %v889 = vmin.f32 %v721, 1.0
        %v890 = vmin.f32 %v722, 1.0
        %v891 = vmin.f32 %v723, 1.0
        %v892 = vmin.f32 %v724, 1.0
        %v893 = vmin.f32 %v725, 1.0
        %v894 = vmin.f32 %v726, 1.0
        %v895 = vmin.f32 %v727, 1.0
        %v896 = vmin.f32 %v728, 1.0
        %v897 = vmin.f32 %v729, 1.0
        %v898 = vmin.f32 %v730, 1.0
        %v899 = vmin.f32 %v731, 1.0
        %v900 = vmin.f32 %v732, 1.0
        %v901 = vmin.f32 %v733, 1.0
        %v902 = vmin.f32 %v734, 1.0
        %v903 = vmin.f32 %v735, 1.0
        %v904 = vmin.f32 %v736, 1.0
        %v905 = vmin.f32 %v737, 1.0
        %v906 = vmin.f32 %v738, 1.0
        %v907 = vmin.f32 %v739, 1.0
        %v908 = vmin.f32 %v740, 1.0
        %v909 = vmin.f32 %v741, 1.0
        %v910 = vmin.f32 %v742, 1.0
        %v911 = vmin.f32 %v743, 1.0
        %v912 = vmin.f32 %v744, 1.0
        %v913 = vmin.f32 %v745, 1.0
        %v914 = vmin.f32 %v746, 1.0
        %v915 = vmin.f32 %v747, 1.0
        %v916 = vmin.f32 %v748, 1.0
        %v917 = vmin.f32 %v749, 1.0
        %v918 = vmin.f32 %v750, 1.0
        %v919 = vmin.f32 %v751, 1.0
        %v920 = vmin.f32 %v752, 1.0
        %v921 = vmin.f32 %v753, 1.0
        %v922 = vmin.f32 %v754, 1.0
        %v923 = vmin.f32 %v755, 1.0
        %v924 = vmin.f32 %v756, 1.0
        %v925 = vmin.f32 %v757, 1.0
        %v926 = vmin.f32 %v758, 1.0
        %v927 = vmin.f32 %v759, 1.0
        %v928 = vmin.f32 %v760, 1.0
        %v929 = vmin.f32 %v761, 1.0
        %v930 = vmin.f32 %v762, 1.0
        %v931 = vmin.f32 %v763, 1.0
        %v932 = vmin.f32 %v764, 1.0
        %v933 = vmin.f32 %v765, 1.0
        %v934 = vmin.f32 %v766, 1.0
        %v935 = vmin.f32 %v767, 1.0
        %v936 = vmin.f32 %v768, 1.0
        %v937 = vmin.f32 %v769, 1.0
        %v938 = vmin.f32 %v770, 1.0
        %v939 = vmin.f32 %v771, 1.0
        %v940 = vmin.f32 %v772, 1.0
        %v941 = vmin.f32 %v773, 1.0
        %v942 = vmin.f32 %v774, 1.0
        %v943 = vmin.f32 %v775, 1.0
        %v944 = vmin.f32 %v776, 1.0
        %v945 = vmin.f32 %v777, 1.0
        %v946 = vmin.f32 %v778, 1.0
        %v947 = vmin.f32 %v779, 1.0
        %v948 = vmin.f32 %v780, 1.0
        %v949 = vmin.f32 %v781, 1.0
        %v950 = vmin.f32 %v782, 1.0
        %v951 = vmin.f32 %v783, 1.0
        %v952 = vmin.f32 %v784, 1.0
        %v953 = vmin.f32 %v785, 1.0
        %v954 = vmin.f32 %v786, 1.0
        %v955 = vmin.f32 %v787, 1.0
        %v956 = vmin.f32 %v788, 1.0
        %v957 = vmin.f32 %v789, 1.0
        %v958 = vmin.f32 %v790, 1.0
        %v959 = vmin.f32 %v791, 1.0
        %v960 = vmin.f32 %v792, 1.0
        %961 = vst [vmem:[%s112] sm:$0xff] %v793
        %vm962 = vcmask 785408
        %963 = vst.msk [vmem:[%s112 + $0x8] sm:$0xff] %vm962, %v794
        %964 = vst [vmem:[%s112 + $0x10] sm:$0xff] %v795
        %965 = vst.msk [vmem:[%s112 + $0x18] sm:$0xff] %vm962, %v796
        %966 = vst [vmem:[%s112 + $0x20] sm:$0xff] %v797
        %967 = vst.msk [vmem:[%s112 + $0x28] sm:$0xff] %vm962, %v798
        %968 = vst [vmem:[%s112 + $0x30] sm:$0xff] %v799
        %969 = vst.msk [vmem:[%s112 + $0x38] sm:$0xff] %vm962, %v800
        %970 = vst [vmem:[%s112 + $0x40] sm:$0xff] %v801
        %971 = vst.msk [vmem:[%s112 + $0x48] sm:$0xff] %vm962, %v802
        %972 = vst [vmem:[%s112 + $0x50] sm:$0xff] %v803
        %973 = vst.msk [vmem:[%s112 + $0x58] sm:$0xff] %vm962, %v804
        %974 = vst [vmem:[%s112 + $0x60] sm:$0xff] %v805
        %975 = vst.msk [vmem:[%s112 + $0x68] sm:$0xff] %vm962, %v806
        %976 = vst [vmem:[%s112 + $0x70] sm:$0xff] %v807
        %977 = vst.msk [vmem:[%s112 + $0x78] sm:$0xff] %vm962, %v808
        %978 = vst [vmem:[%s112 + $0x80] sm:$0xff] %v809
        %979 = vst.msk [vmem:[%s112 + $0x88] sm:$0xff] %vm962, %v810
        %980 = vst [vmem:[%s112 + $0x90] sm:$0xff] %v811
        %981 = vst.msk [vmem:[%s112 + $0x98] sm:$0xff] %vm962, %v812
        %982 = vst [vmem:[%s112 + $0xa0] sm:$0xff] %v813
        %983 = vst.msk [vmem:[%s112 + $0xa8] sm:$0xff] %vm962, %v814
        %984 = vst [vmem:[%s112 + $0xb0] sm:$0xff] %v815
        %985 = vst.msk [vmem:[%s112 + $0xb8] sm:$0xff] %vm962, %v816
        %986 = vst [vmem:[%s112 + $0xc0] sm:$0xff] %v817
        %987 = vst.msk [vmem:[%s112 + $0xc8] sm:$0xff] %vm962, %v818
        %988 = vst [vmem:[%s112 + $0xd0] sm:$0xff] %v819
        %989 = vst.msk [vmem:[%s112 + $0xd8] sm:$0xff] %vm962, %v820
        %990 = vst [vmem:[%s112 + $0xe0] sm:$0xff] %v821
        %991 = vst.msk [vmem:[%s112 + $0xe8] sm:$0xff] %vm962, %v822
        %992 = vst [vmem:[%s112 + $0xf0] sm:$0xff] %v823
        %993 = vst.msk [vmem:[%s112 + $0xf8] sm:$0xff] %vm962, %v824
        %994 = vst [vmem:[%s112 + $0x100] sm:$0xff] %v825
        %995 = vst.msk [vmem:[%s112 + $0x108] sm:$0xff] %vm962, %v826
        %996 = vst [vmem:[%s112 + $0x110] sm:$0xff] %v827
        %997 = vst.msk [vmem:[%s112 + $0x118] sm:$0xff] %vm962, %v828
        %998 = vst [vmem:[%s112 + $0x120] sm:$0xff] %v829
        %999 = vst.msk [vmem:[%s112 + $0x128] sm:$0xff] %vm962, %v830
        %1000 = vst [vmem:[%s112 + $0x130] sm:$0xff] %v831
        %1001 = vst.msk [vmem:[%s112 + $0x138] sm:$0xff] %vm962, %v832
        %1002 = vst [vmem:[%s112 + $0x140] sm:$0xff] %v833
        %1003 = vst.msk [vmem:[%s112 + $0x148] sm:$0xff] %vm962, %v834
        %1004 = vst [vmem:[%s112 + $0x150] sm:$0xff] %v835
        %1005 = vst.msk [vmem:[%s112 + $0x158] sm:$0xff] %vm962, %v836
        %1006 = vst [vmem:[%s112 + $0x160] sm:$0xff] %v837
        %1007 = vst.msk [vmem:[%s112 + $0x168] sm:$0xff] %vm962, %v838
        %1008 = vst [vmem:[%s112 + $0x170] sm:$0xff] %v839
        %1009 = vst.msk [vmem:[%s112 + $0x178] sm:$0xff] %vm962, %v840
        %1010 = vst [vmem:[%s112 + $0x180] sm:$0xff] %v841
        %1011 = vst.msk [vmem:[%s112 + $0x188] sm:$0xff] %vm962, %v842
        %1012 = vst [vmem:[%s112 + $0x190] sm:$0xff] %v843
        %1013 = vst.msk [vmem:[%s112 + $0x198] sm:$0xff] %vm962, %v844
        %1014 = vst [vmem:[%s112 + $0x1a0] sm:$0xff] %v845
        %1015 = vst.msk [vmem:[%s112 + $0x1a8] sm:$0xff] %vm962, %v846
        %1016 = vst [vmem:[%s112 + $0x1b0] sm:$0xff] %v847
        %1017 = vst.msk [vmem:[%s112 + $0x1b8] sm:$0xff] %vm962, %v848
        %1018 = vst [vmem:[%s112 + $0x1c0] sm:$0xff] %v849
        %1019 = vst.msk [vmem:[%s112 + $0x1c8] sm:$0xff] %vm962, %v850
        %1020 = vst [vmem:[%s112 + $0x1d0] sm:$0xff] %v851
        %1021 = vst.msk [vmem:[%s112 + $0x1d8] sm:$0xff] %vm962, %v852
        %1022 = vst [vmem:[%s112 + $0x1e0] sm:$0xff] %v853
        %1023 = vst.msk [vmem:[%s112 + $0x1e8] sm:$0xff] %vm962, %v854
        %1024 = vst [vmem:[%s112 + $0x1f0] sm:$0xff] %v855
        %1025 = vst.msk [vmem:[%s112 + $0x1f8] sm:$0xff] %vm962, %v856
        %1026 = vst [vmem:[%s112 + $0x200] sm:$0xff] %v857
        %1027 = vst.msk [vmem:[%s112 + $0x208] sm:$0xff] %vm962, %v858
        %1028 = vst [vmem:[%s112 + $0x210] sm:$0xff] %v859
        %1029 = vst.msk [vmem:[%s112 + $0x218] sm:$0xff] %vm962, %v860
        %1030 = vst [vmem:[%s112 + $0x220] sm:$0xff] %v861
        %1031 = vst.msk [vmem:[%s112 + $0x228] sm:$0xff] %vm962, %v862
        %1032 = vst [vmem:[%s112 + $0x230] sm:$0xff] %v863
        %1033 = vst.msk [vmem:[%s112 + $0x238] sm:$0xff] %vm962, %v864
        %1034 = vst [vmem:[%s112 + $0x240] sm:$0xff] %v865
        %1035 = vst.msk [vmem:[%s112 + $0x248] sm:$0xff] %vm962, %v866
        %1036 = vst [vmem:[%s112 + $0x250] sm:$0xff] %v867
        %1037 = vst.msk [vmem:[%s112 + $0x258] sm:$0xff] %vm962, %v868
        %1038 = vst [vmem:[%s112 + $0x260] sm:$0xff] %v869
        %1039 = vst.msk [vmem:[%s112 + $0x268] sm:$0xff] %vm962, %v870
        %1040 = vst [vmem:[%s112 + $0x270] sm:$0xff] %v871
        %1041 = vst.msk [vmem:[%s112 + $0x278] sm:$0xff] %vm962, %v872
        %1042 = vst [vmem:[%s112 + $0x280] sm:$0xff] %v873
        %1043 = vst.msk [vmem:[%s112 + $0x288] sm:$0xff] %vm962, %v874
        %1044 = vst [vmem:[%s112 + $0x290] sm:$0xff] %v875
        %1045 = vst.msk [vmem:[%s112 + $0x298] sm:$0xff] %vm962, %v876
        %1046 = vst [vmem:[%s112 + $0x2a0] sm:$0xff] %v877
        %1047 = vst.msk [vmem:[%s112 + $0x2a8] sm:$0xff] %vm962, %v878
        %1048 = vst [vmem:[%s112 + $0x2b0] sm:$0xff] %v879
        %1049 = vst.msk [vmem:[%s112 + $0x2b8] sm:$0xff] %vm962, %v880
        %1050 = vst [vmem:[%s112 + $0x2c0] sm:$0xff] %v881
        %1051 = vst.msk [vmem:[%s112 + $0x2c8] sm:$0xff] %vm962, %v882
        %1052 = vst [vmem:[%s112 + $0x2d0] sm:$0xff] %v883
        %1053 = vst.msk [vmem:[%s112 + $0x2d8] sm:$0xff] %vm962, %v884
        %1054 = vst [vmem:[%s112 + $0x2e0] sm:$0xff] %v885
        %1055 = vst.msk [vmem:[%s112 + $0x2e8] sm:$0xff] %vm962, %v886
        %1056 = vst [vmem:[%s112 + $0x2f0] sm:$0xff] %v887
        %1057 = vst.msk [vmem:[%s112 + $0x2f8] sm:$0xff] %vm962, %v888
        %1058 = vst [vmem:[%s112 + $0x300] sm:$0xff] %v889
        %1059 = vst.msk [vmem:[%s112 + $0x308] sm:$0xff] %vm962, %v890
        %1060 = vst [vmem:[%s112 + $0x310] sm:$0xff] %v891
        %1061 = vst.msk [vmem:[%s112 + $0x318] sm:$0xff] %vm962, %v892
        %1062 = vst [vmem:[%s112 + $0x320] sm:$0xff] %v893
        %1063 = vst.msk [vmem:[%s112 + $0x328] sm:$0xff] %vm962, %v894
        %1064 = vst [vmem:[%s112 + $0x330] sm:$0xff] %v895
        %1065 = vst.msk [vmem:[%s112 + $0x338] sm:$0xff] %vm962, %v896
        %1066 = vst [vmem:[%s112 + $0x340] sm:$0xff] %v897
        %1067 = vst.msk [vmem:[%s112 + $0x348] sm:$0xff] %vm962, %v898
        %1068 = vst [vmem:[%s112 + $0x350] sm:$0xff] %v899
        %1069 = vst.msk [vmem:[%s112 + $0x358] sm:$0xff] %vm962, %v900
        %1070 = vst [vmem:[%s112 + $0x360] sm:$0xff] %v901
        %1071 = vst.msk [vmem:[%s112 + $0x368] sm:$0xff] %vm962, %v902
        %1072 = vst [vmem:[%s112 + $0x370] sm:$0xff] %v903
        %1073 = vst.msk [vmem:[%s112 + $0x378] sm:$0xff] %vm962, %v904
        %1074 = vst [vmem:[%s112 + $0x380] sm:$0xff] %v905
        %1075 = vst.msk [vmem:[%s112 + $0x388] sm:$0xff] %vm962, %v906
        %1076 = vst [vmem:[%s112 + $0x390] sm:$0xff] %v907
        %1077 = vst.msk [vmem:[%s112 + $0x398] sm:$0xff] %vm962, %v908
        %1078 = vst [vmem:[%s112 + $0x3a0] sm:$0xff] %v909
        %1079 = vst.msk [vmem:[%s112 + $0x3a8] sm:$0xff] %vm962, %v910
        %1080 = vst [vmem:[%s112 + $0x3b0] sm:$0xff] %v911
        %1081 = vst.msk [vmem:[%s112 + $0x3b8] sm:$0xff] %vm962, %v912
        %1082 = vst [vmem:[%s112 + $0x3c0] sm:$0xff] %v913
        %1083 = vst.msk [vmem:[%s112 + $0x3c8] sm:$0xff] %vm962, %v914
        %1084 = vst [vmem:[%s112 + $0x3d0] sm:$0xff] %v915
        %1085 = vst.msk [vmem:[%s112 + $0x3d8] sm:$0xff] %vm962, %v916
        %1086 = vst [vmem:[%s112 + $0x3e0] sm:$0xff] %v917
        %1087 = vst.msk [vmem:[%s112 + $0x3e8] sm:$0xff] %vm962, %v918
        %1088 = vst [vmem:[%s112 + $0x3f0] sm:$0xff] %v919
        %1089 = vst.msk [vmem:[%s112 + $0x3f8] sm:$0xff] %vm962, %v920
        %1090 = vst [vmem:[%s112 + $0x400] sm:$0xff] %v921
        %1091 = vst.msk [vmem:[%s112 + $0x408] sm:$0xff] %vm962, %v922
        %1092 = vst [vmem:[%s112 + $0x410] sm:$0xff] %v923
        %1093 = vst.msk [vmem:[%s112 + $0x418] sm:$0xff] %vm962, %v924
        %1094 = vst [vmem:[%s112 + $0x420] sm:$0xff] %v925
        %1095 = vst.msk [vmem:[%s112 + $0x428] sm:$0xff] %vm962, %v926
        %1096 = vst [vmem:[%s112 + $0x430] sm:$0xff] %v927
        %1097 = vst.msk [vmem:[%s112 + $0x438] sm:$0xff] %vm962, %v928
        %1098 = vst [vmem:[%s112 + $0x440] sm:$0xff] %v929
        %1099 = vst.msk [vmem:[%s112 + $0x448] sm:$0xff] %vm962, %v930
        %1100 = vst [vmem:[%s112 + $0x450] sm:$0xff] %v931
        %1101 = vst.msk [vmem:[%s112 + $0x458] sm:$0xff] %vm962, %v932
        %1102 = vst [vmem:[%s112 + $0x460] sm:$0xff] %v933
        %1103 = vst.msk [vmem:[%s112 + $0x468] sm:$0xff] %vm962, %v934
        %1104 = vst [vmem:[%s112 + $0x470] sm:$0xff] %v935
        %1105 = vst.msk [vmem:[%s112 + $0x478] sm:$0xff] %vm962, %v936
        %1106 = vst [vmem:[%s112 + $0x480] sm:$0xff] %v937
        %1107 = vst.msk [vmem:[%s112 + $0x488] sm:$0xff] %vm962, %v938
        %1108 = vst [vmem:[%s112 + $0x490] sm:$0xff] %v939
        %1109 = vst.msk [vmem:[%s112 + $0x498] sm:$0xff] %vm962, %v940
        %1110 = vst [vmem:[%s112 + $0x4a0] sm:$0xff] %v941
        %1111 = vst.msk [vmem:[%s112 + $0x4a8] sm:$0xff] %vm962, %v942
        %1112 = vst [vmem:[%s112 + $0x4b0] sm:$0xff] %v943
        %1113 = vst.msk [vmem:[%s112 + $0x4b8] sm:$0xff] %vm962, %v944
        %1114 = vst [vmem:[%s112 + $0x4c0] sm:$0xff] %v945
        %1115 = vst.msk [vmem:[%s112 + $0x4c8] sm:$0xff] %vm962, %v946
        %1116 = vst [vmem:[%s112 + $0x4d0] sm:$0xff] %v947
        %1117 = vst.msk [vmem:[%s112 + $0x4d8] sm:$0xff] %vm962, %v948
        %1118 = vst [vmem:[%s112 + $0x4e0] sm:$0xff] %v949
        %1119 = vst.msk [vmem:[%s112 + $0x4e8] sm:$0xff] %vm962, %v950
        %1120 = vst [vmem:[%s112 + $0x4f0] sm:$0xff] %v951
        %1121 = vst.msk [vmem:[%s112 + $0x4f8] sm:$0xff] %vm962, %v952
        %1122 = vst [vmem:[%s112 + $0x500] sm:$0xff] %v953
        %1123 = vst.msk [vmem:[%s112 + $0x508] sm:$0xff] %vm962, %v954
        %1124 = vst [vmem:[%s112 + $0x510] sm:$0xff] %v955
        %1125 = vst.msk [vmem:[%s112 + $0x518] sm:$0xff] %vm962, %v956
        %1126 = vst [vmem:[%s112 + $0x520] sm:$0xff] %v957
        %1127 = vst.msk [vmem:[%s112 + $0x528] sm:$0xff] %vm962, %v958
        %1128 = vst [vmem:[%s112 + $0x530] sm:$0xff] %v959
        %1129 = vst.msk [vmem:[%s112 + $0x538] sm:$0xff] %vm962, %v960
        %s1130 = sand.u32 %s49, 1
        %s1131 = scalar_lea.sflag [#allocation3], %s1130
        %s1132 = sand.u32 %s49, 1
        %s1133 = smul.addr %s1132, 1344
        %s1134 = scalar_lea.vmem [#allocation2], %s1133
        // Predicated region
        $region25: #{branch_1_fun.1} parent=23 // pred_check
          %p1135 = pneg %p59
        $region26: #{branch_1_fun.1} parent=23 // pred_check_branch
          %1137 = sbr.rel (%p1135) target = $region28
        $region27: #{branch_1_fun.1} parent=23 // pred_region
          %s1138 = smul.u32 84, %s15
          %1140 = vsyncadd %s1131, 0
          %s1141 = smul.addr %s1138, 2
          %s1142 = smul.addr %s1141, 8
          %s1143 = scalar_lea.hbm %s1, %s1142
          %s1144 = sshll.u32 %s1134, 4
          %s1145 = int_to_ptr.vmem [resolvable:$true] %s1144
          %s1146 = sshll.u32 %s1143, 4
          %s1147 = int_to_ptr.hbm [resolvable:$true] %s1146
          %1152 = dma.vmem_to_hbm [thread:$0]  %s1145, 21504, %s1147, %s1131, 256, 256, 16
        $region28: #{branch_1_fun.1} parent=23 // pred_fallthru
          _
      $region24: #{branch_1_fun.1} parent=5 // pred_fallthru
        _
      %p1153 = scmp.le.s32.totalorder 2, %s10
      // Predicated region
      $region29: #{branch_1_fun.1} parent=5 // pred_check
        %p1154 = pneg %p1153
      $region30: #{branch_1_fun.1} parent=5 // pred_check_branch
        %1156 = sbr.rel (%p1154) target = $region32
      $region31: #{branch_1_fun.1} parent=5 // pred_region
        %s1157 = ssub.s32 %s10, 2
        // Predicated region
        $region33: #{branch_1_fun.1} parent=31 // pred_check
          %p1158 = pneg %p65
        $region34: #{branch_1_fun.1} parent=31 // pred_check_branch
          %1160 = sbr.rel (%p1158) target = $region36
        $region35: #{branch_1_fun.1} parent=31 // pred_region
          %s1161 = sand.u32 %s50, 1
          %s1162 = scalar_lea.sflag [#allocation3], %s1161
          %s1163 = sand.u32 %s50, 1
          %s1164 = smul.addr %s1163, 1344
          %s1165 = scalar_lea.vmem [#allocation2], %s1164
          %1167 = dma.done %s1162, 21504
        $region36: #{branch_1_fun.1} parent=31 // pred_fallthru
          _
      $region32: #{branch_1_fun.1} parent=5 // pred_fallthru
        _
    $region6: #{branch_1_fun.1} parent=1 // loop_footer
      %s14 = sadd.s32 1, %s10
    $region7: #{branch_1_fun.1} parent=1 // loop_footer_branch
      %9 = sbr.rel target = $region3
    $region8: #{branch_1_fun.1} parent=1 // loop_exit
      _
    %1168 = vsyncpa [#allocation3], 1
    %s1169 = scalar_lea.sflag [#allocation3], 1
    %1170 = vsyncpa %s1169, 1

</llo_original>
